<compile_context>
chip_gen: v6e
topology: v6e:2x2x1
jax: 0.10.0
libtpu: 0.0.40
codegen_flags: <defaults>
</compile_context>

<pallas_src>
import jax
import jax.numpy as jnp
from jax import lax
from jax.experimental import pallas as pl
from jax.experimental.pallas import tpu as pltpu

# TODO(synk): the pretrained 'bert-base-uncased' encoder has no clean Pallas equivalent
# here; its pooled [CLS] hidden state (B, 768) is passed in as the text_features input.

TEXT_DIM = 768
HID1 = 256
META_HID = 64          # logical width of the metadata encoder
META_HID_PAD = 128     # lane-padded width used inside the kernel
HID2 = 64              # logical width of classifier[3]
HID2_PAD = 128         # lane-padded width; lane BIAS_LANE is a constant-1 bias lane
BIAS_LANE = HID2       # = 64
NUM_CLASSES = 2
W3_ROWS = 8            # final-layer LHS padded to a full sublane (rows 2..7 are zero)


def classifier_kernel(text_ref, meta_ref,
                      wm_ref, bm_ref,
                      w1t_ref, w1m_ref, b1_ref,
                      w2_ref, b2_ref,
                      w3_ref,
                      out_ref):
    # Activations arrive in their native dtype (f32 from BERT); cast to bf16 on-tile.
    text = text_ref[...].astype(jnp.bfloat16)          # (TB, 768)
    meta = meta_ref[...].astype(jnp.bfloat16)          # (TB, M)

    # metadata_encoder: Linear(M, 64) + ReLU (Dropout == identity at eval).
    # wm/bm are zero in padded lanes 64..127, so those lanes of h_meta stay exactly 0.
    h_meta = jnp.dot(meta, wm_ref[...], preferred_element_type=jnp.float32)
    h_meta = jnp.maximum(h_meta + bm_ref[...], 0.0)     # (TB, 128) f32

    # classifier[0]: Linear(768 + 64, 256) over concat(text, h_meta), realized as two
    # matmuls whose partial products are summed; ReLU.
    h1 = (jnp.dot(text, w1t_ref[...], preferred_element_type=jnp.float32)
          + jnp.dot(h_meta.astype(jnp.bfloat16), w1m_ref[...],
                    preferred_element_type=jnp.float32)
          + b1_ref[...])
    h1 = jnp.maximum(h1, 0.0)                           # (TB, 256) f32

    # classifier[3]: Linear(256, 64) + ReLU, lane-padded to 128.  b2[BIAS_LANE] == 1 and
    # w2[:, BIAS_LANE] == 0, so h2[:, BIAS_LANE] == 1 exactly (used to fold b3 below);
    # lanes 65..127 stay exactly 0.
    h2 = jnp.dot(h1.astype(jnp.bfloat16), w2_ref[...],
                 preferred_element_type=jnp.float32) + b2_ref[...]
    h2 = jnp.maximum(h2, 0.0)                           # (TB, 128) f32

    # classifier[5]: Linear(64, 2) computed transposed as w3 @ h2^T (NT matmul) so the
    # output is a lane-dense (2, TB) block; b3 rides in w3[:, BIAS_LANE] * h2's bias lane.
    logits_t = lax.dot_general(
        w3_ref[...], h2.astype(jnp.bfloat16),
        dimension_numbers=(((1,), (1,)), ((), ())),
        preferred_element_type=jnp.float32)             # (8, TB) f32; rows 2..7 unused
    l0 = logits_t[0:1, :]
    l1 = logits_t[1:2, :]

    # Softmax(dim=1) over the 2 classes, numerically stable, all f32.
    m = jnp.maximum(l0, l1)
    e0 = jnp.exp(l0 - m)
    e1 = jnp.exp(l1 - m)
    denom = e0 + e1
    out_ref[0:1, :] = e0 / denom
    out_ref[1:2, :] = e1 / denom


def _round_up(x, m):
    return ((x + m - 1) // m) * m


def _pick_batch_tile(batch):
    # Small batches: a single (possibly padded) tile; grid == 1.
    if batch < 256:
        return _round_up(max(batch, 1), 16)
    # Large batches: >= 2 grid steps (so v7x's two TensorCores both get work), tile a
    # multiple of 128 (required by the lane-tiled transposed output), capped at 512 rows
    # (~85% of HBM roofline per the measured tile-size sweep, a few MiB of VMEM).
    return min(512, _round_up((batch + 1) // 2, 128))


@jax.jit
def job_listing_classifier(text_features, metadata, params):
    """text_features: (B, 768) BERT [CLS] state (f32 or bf16); metadata: (B, M)."""
    B = text_features.shape[0]
    M = metadata.shape[1]

    TB = _pick_batch_tile(B)
    num_tiles = pl.cdiv(B, TB)
    B_out = num_tiles * TB

    out_t = pl.pallas_call(
        classifier_kernel,
        out_shape=jax.ShapeDtypeStruct((NUM_CLASSES, B_out), jnp.float32),
        grid=(num_tiles,),
        in_specs=[
            pl.BlockSpec((TB, TEXT_DIM), lambda i: (i, 0)),         # text (native dtype)
            pl.BlockSpec((TB, M), lambda i: (i, 0)),                # metadata (unpadded)
            pl.BlockSpec((M, META_HID_PAD), lambda i: (0, 0)),      # wm  (bf16)
            pl.BlockSpec((1, META_HID_PAD), lambda i: (0, 0)),      # bm  (f32)
            pl.BlockSpec((TEXT_DIM, HID1), lambda i: (0, 0)),       # w1t (bf16)
            pl.BlockSpec((META_HID_PAD, HID1), lambda i: (0, 0)),   # w1m (bf16)
            pl.BlockSpec((1, HID1), lambda i: (0, 0)),              # b1  (f32)
            pl.BlockSpec((HID1, HID2_PAD), lambda i: (0, 0)),       # w2  (bf16)
            pl.BlockSpec((1, HID2_PAD), lambda i: (0, 0)),          # b2  (f32, bias lane=1)
            pl.BlockSpec((W3_ROWS, HID2_PAD), lambda i: (0, 0)),    # w3  (bf16, b3 folded)
        ],
        out_specs=pl.BlockSpec((NUM_CLASSES, TB), lambda i: (0, i)),
        compiler_params=pltpu.CompilerParams(
            dimension_semantics=("parallel",),
            # v5e's default scoped-VMEM budget is 16 MiB; be explicit for 512-row tiles.
            vmem_limit_bytes=32 * 1024 * 1024,
        ),
    )(text_features, metadata,
      params["wm"], params["bm"],
      params["w1t"], params["w1m"], params["b1"],
      params["w2"], params["b2"],
      params["w3"])

    # (2, B_out) -> (B, 2); ragged-tile padding columns are sliced off.
    return out_t[:, :B].T


def init_params(key, metadata_size):
    """PyTorch-style uniform(+-1/sqrt(fan_in)) init, raw (unpadded) f32 weights."""
    def linear(key, fan_in, fan_out):
        kw, kb = jax.random.split(key)
        bound = 1.0 / jnp.sqrt(fan_in)
        w = jax.random.uniform(kw, (fan_in, fan_out), jnp.float32, -bound, bound)
        b = jax.random.uniform(kb, (1, fan_out), jnp.float32, -bound, bound)
        return w, b

    k0, k1, k2, k3 = jax.random.split(key, 4)
    wm, bm = linear(k0, metadata_size, META_HID)     # metadata_encoder Linear(M, 64)
    w1, b1 = linear(k1, TEXT_DIM + META_HID, HID1)   # classifier Linear(832, 256)
    w2, b2 = linear(k2, HID1, HID2)                  # classifier Linear(256, 64)
    w3, b3 = linear(k3, HID2, NUM_CLASSES)           # classifier Linear(64, 2)
    return {"wm": wm, "bm": bm, "w1": w1, "b1": b1,
            "w2": w2, "b2": b2, "w3": w3, "b3": b3}


def prepare_params(raw, metadata_size):
    """Lane-pad / split / transpose the raw weights into the kernel layout (once, offline)."""
    wm = jnp.zeros((metadata_size, META_HID_PAD), jnp.float32)
    wm = wm.at[:, :META_HID].set(raw["wm"])
    bm = jnp.zeros((1, META_HID_PAD), jnp.float32).at[:, :META_HID].set(raw["bm"])

    w1t = raw["w1"][:TEXT_DIM, :]                                    # (768, 256)
    w1m = jnp.zeros((META_HID_PAD, HID1), jnp.float32)
    w1m = w1m.at[:META_HID, :].set(raw["w1"][TEXT_DIM:, :])          # (128, 256)

    # Lane BIAS_LANE of h2 is forced to exactly 1 (w2 column zero, b2 entry one) so the
    # final layer's bias can be folded into w3[:, BIAS_LANE].
    w2 = jnp.zeros((HID1, HID2_PAD), jnp.float32).at[:, :HID2].set(raw["w2"])
    b2 = jnp.zeros((1, HID2_PAD), jnp.float32).at[:, :HID2].set(raw["b2"])
    b2 = b2.at[:, BIAS_LANE].set(1.0)

    w3 = jnp.zeros((W3_ROWS, HID2_PAD), jnp.float32)
    w3 = w3.at[:NUM_CLASSES, :HID2].set(raw["w3"].T)                 # (2, 64)
    w3 = w3.at[:NUM_CLASSES, BIAS_LANE].set(raw["b3"][0, :])         # fold b3

    return {
        "wm": wm.astype(jnp.bfloat16), "bm": bm,
        "w1t": w1t.astype(jnp.bfloat16), "w1m": w1m.astype(jnp.bfloat16),
        "b1": raw["b1"],
        "w2": w2.astype(jnp.bfloat16), "b2": b2,
        "w3": w3.astype(jnp.bfloat16),
    }


def reference_forward(text, meta, raw):
    """Pure-JAX f32 reference of the PyTorch head (eval mode)."""
    h_meta = jax.nn.relu(meta @ raw["wm"] + raw["bm"])
    combined = jnp.concatenate([text, h_meta], axis=1)
    h1 = jax.nn.relu(combined @ raw["w1"] + raw["b1"])
    h2 = jax.nn.relu(h1 @ raw["w2"] + raw["b2"])
    logits = h2 @ raw["w3"] + raw["b3"]
    return jax.nn.softmax(logits, axis=1)


if __name__ == "__main__":
    B = 2
    METADATA_SIZE = 16

    key = jax.random.PRNGKey(0)
    k_text, k_meta, k_params = jax.random.split(key, 3)

    # Stand-in for bert(input_ids, attention_mask).last_hidden_state[:, 0, :]
    text_features = jax.random.normal(k_text, (B, TEXT_DIM), jnp.float32)
    metadata = jax.random.normal(k_meta, (B, METADATA_SIZE), jnp.float32)

    raw_params = init_params(k_params, METADATA_SIZE)
    params = prepare_params(raw_params, METADATA_SIZE)

    probs = job_listing_classifier(text_features, metadata, params)
    probs = jax.block_until_ready(probs)

    ref = reference_forward(text_features, metadata, raw_params)

    assert probs.shape == (B, NUM_CLASSES)
    assert bool(jnp.all(jnp.isfinite(probs)))
    assert bool(jnp.allclose(jnp.sum(probs, axis=1), 1.0, atol=1e-5))
    assert bool(jnp.allclose(probs, ref, atol=5e-2))  # bf16 matmul tolerance
    print("KERNEL_OK")
</pallas_src>

<mosaic_0001>
module attributes {stable_mosaic.version = 11 : i64} {
  func.func @classifier_kernel(%arg0: i32, %arg1: memref<16x768xf32, #tpu.memory_space<vmem>>, %arg2: memref<16x16xf32, #tpu.memory_space<vmem>>, %arg3: memref<16x128xbf16, #tpu.memory_space<vmem>>, %arg4: memref<1x128xf32, #tpu.memory_space<vmem>>, %arg5: memref<768x256xbf16, #tpu.memory_space<vmem>>, %arg6: memref<128x256xbf16, #tpu.memory_space<vmem>>, %arg7: memref<1x256xf32, #tpu.memory_space<vmem>>, %arg8: memref<256x128xbf16, #tpu.memory_space<vmem>>, %arg9: memref<1x128xf32, #tpu.memory_space<vmem>>, %arg10: memref<8x128xbf16, #tpu.memory_space<vmem>>, %arg11: memref<2x16xf32, #tpu.memory_space<vmem>>) attributes {dimension_semantics = [#tpu.dimension_semantics<parallel>], iteration_bounds = array<i64: 1>, scalar_prefetch = 0 : i64, scratch_operands = 0 : i64, tpu.core_type = #tpu.core_type<tc>, window_params = [{transform_indices = @transform_0, window_bounds = array<i64: 16, 768>}, {transform_indices = @transform_1, window_bounds = array<i64: 16, 16>}, {pipeline_mode = #tpu.pipeline_mode<synchronous>, transform_indices = @transform_2, window_bounds = array<i64: 16, 128>}, {pipeline_mode = #tpu.pipeline_mode<synchronous>, transform_indices = @transform_3, window_bounds = array<i64: 1, 128>}, {pipeline_mode = #tpu.pipeline_mode<synchronous>, transform_indices = @transform_4, window_bounds = array<i64: 768, 256>}, {pipeline_mode = #tpu.pipeline_mode<synchronous>, transform_indices = @transform_5, window_bounds = array<i64: 128, 256>}, {pipeline_mode = #tpu.pipeline_mode<synchronous>, transform_indices = @transform_6, window_bounds = array<i64: 1, 256>}, {pipeline_mode = #tpu.pipeline_mode<synchronous>, transform_indices = @transform_7, window_bounds = array<i64: 256, 128>}, {pipeline_mode = #tpu.pipeline_mode<synchronous>, transform_indices = @transform_8, window_bounds = array<i64: 1, 128>}, {pipeline_mode = #tpu.pipeline_mode<synchronous>, transform_indices = @transform_9, window_bounds = array<i64: 8, 128>}, {transform_indices = @transform_10, window_bounds = array<i64: 2, 16>}]} {
    %c0 = arith.constant 0 : index
    %c0_0 = arith.constant 0 : index
    %0 = vector.load %arg1[%c0, %c0_0] : memref<16x768xf32, #tpu.memory_space<vmem>>, vector<16x768xf32>
    %1 = arith.truncf %0 : vector<16x768xf32> to vector<16x768xbf16>
    %c0_1 = arith.constant 0 : index
    %c0_2 = arith.constant 0 : index
    %2 = vector.load %arg2[%c0_1, %c0_2] : memref<16x16xf32, #tpu.memory_space<vmem>>, vector<16x16xf32>
    %3 = arith.truncf %2 : vector<16x16xf32> to vector<16x16xbf16>
    %c0_3 = arith.constant 0 : index
    %c0_4 = arith.constant 0 : index
    %4 = vector.load %arg3[%c0_3, %c0_4] : memref<16x128xbf16, #tpu.memory_space<vmem>>, vector<16x128xbf16>
    %cst = arith.constant dense<0.000000e+00> : vector<16x128xf32>
    %5 = tpu.matmul %3, %4, %cst {dimension_numbers = #tpu.dot_dimension_numbers<[1], [0], [0], [1], [0, 0, 1, 1], [], []>} : vector<16x16xbf16>, vector<16x128xbf16>, vector<16x128xf32> -> vector<16x128xf32>
    %c0_5 = arith.constant 0 : index
    %c0_6 = arith.constant 0 : index
    %6 = vector.load %arg4[%c0_5, %c0_6] : memref<1x128xf32, #tpu.memory_space<vmem>>, vector<1x128xf32>
    %7 = vector.broadcast %6 : vector<1x128xf32> to vector<16x128xf32>
    %8 = arith.addf %5, %7 : vector<16x128xf32>
    %cst_7 = arith.constant 0.000000e+00 : f32
    %9 = vector.broadcast %cst_7 : f32 to vector<16x128xf32>
    %10 = arith.maximumf %8, %9 : vector<16x128xf32>
    %c0_8 = arith.constant 0 : index
    %c0_9 = arith.constant 0 : index
    %11 = vector.load %arg5[%c0_8, %c0_9] : memref<768x256xbf16, #tpu.memory_space<vmem>>, vector<768x256xbf16>
    %cst_10 = arith.constant dense<0.000000e+00> : vector<16x256xf32>
    %12 = tpu.matmul %1, %11, %cst_10 {dimension_numbers = #tpu.dot_dimension_numbers<[1], [0], [0], [1], [0, 0, 1, 1], [], []>} : vector<16x768xbf16>, vector<768x256xbf16>, vector<16x256xf32> -> vector<16x256xf32>
    %13 = arith.truncf %10 : vector<16x128xf32> to vector<16x128xbf16>
    %c0_11 = arith.constant 0 : index
    %c0_12 = arith.constant 0 : index
    %14 = vector.load %arg6[%c0_11, %c0_12] : memref<128x256xbf16, #tpu.memory_space<vmem>>, vector<128x256xbf16>
    %cst_13 = arith.constant dense<0.000000e+00> : vector<16x256xf32>
    %15 = tpu.matmul %13, %14, %cst_13 {dimension_numbers = #tpu.dot_dimension_numbers<[1], [0], [0], [1], [0, 0, 1, 1], [], []>} : vector<16x128xbf16>, vector<128x256xbf16>, vector<16x256xf32> -> vector<16x256xf32>
    %16 = arith.addf %12, %15 : vector<16x256xf32>
    %c0_14 = arith.constant 0 : index
    %c0_15 = arith.constant 0 : index
    %17 = vector.load %arg7[%c0_14, %c0_15] : memref<1x256xf32, #tpu.memory_space<vmem>>, vector<1x256xf32>
    %18 = vector.broadcast %17 : vector<1x256xf32> to vector<16x256xf32>
    %19 = arith.addf %16, %18 : vector<16x256xf32>
    %cst_16 = arith.constant 0.000000e+00 : f32
    %20 = vector.broadcast %cst_16 : f32 to vector<16x256xf32>
    %21 = arith.maximumf %19, %20 : vector<16x256xf32>
    %22 = arith.truncf %21 : vector<16x256xf32> to vector<16x256xbf16>
    %c0_17 = arith.constant 0 : index
    %c0_18 = arith.constant 0 : index
    %23 = vector.load %arg8[%c0_17, %c0_18] : memref<256x128xbf16, #tpu.memory_space<vmem>>, vector<256x128xbf16>
    %cst_19 = arith.constant dense<0.000000e+00> : vector<16x128xf32>
    %24 = tpu.matmul %22, %23, %cst_19 {dimension_numbers = #tpu.dot_dimension_numbers<[1], [0], [0], [1], [0, 0, 1, 1], [], []>} : vector<16x256xbf16>, vector<256x128xbf16>, vector<16x128xf32> -> vector<16x128xf32>
    %c0_20 = arith.constant 0 : index
    %c0_21 = arith.constant 0 : index
    %25 = vector.load %arg9[%c0_20, %c0_21] : memref<1x128xf32, #tpu.memory_space<vmem>>, vector<1x128xf32>
    %26 = vector.broadcast %25 : vector<1x128xf32> to vector<16x128xf32>
    %27 = arith.addf %24, %26 : vector<16x128xf32>
    %cst_22 = arith.constant 0.000000e+00 : f32
    %28 = vector.broadcast %cst_22 : f32 to vector<16x128xf32>
    %29 = arith.maximumf %27, %28 : vector<16x128xf32>
    %c0_23 = arith.constant 0 : index
    %c0_24 = arith.constant 0 : index
    %30 = vector.load %arg10[%c0_23, %c0_24] : memref<8x128xbf16, #tpu.memory_space<vmem>>, vector<8x128xbf16>
    %31 = arith.truncf %29 : vector<16x128xf32> to vector<16x128xbf16>
    %cst_25 = arith.constant dense<0.000000e+00> : vector<8x16xf32>
    %32 = tpu.matmul %30, %31, %cst_25 {dimension_numbers = #tpu.dot_dimension_numbers<[1], [1], [0], [0], [0, 0, 1, 0], [], []>} : vector<8x128xbf16>, vector<16x128xbf16>, vector<8x16xf32> -> vector<8x16xf32>
    %33 = vector.extract_strided_slice %32 {offsets = [0, 0], sizes = [1, 16], strides = [1, 1]} : vector<8x16xf32> to vector<1x16xf32>
    %34 = vector.extract_strided_slice %32 {offsets = [1, 0], sizes = [1, 16], strides = [1, 1]} : vector<8x16xf32> to vector<1x16xf32>
    %35 = arith.maximumf %33, %34 : vector<1x16xf32>
    %36 = arith.subf %33, %35 : vector<1x16xf32>
    %37 = math.exp %36 : vector<1x16xf32>
    %38 = arith.subf %34, %35 : vector<1x16xf32>
    %39 = math.exp %38 : vector<1x16xf32>
    %40 = arith.addf %37, %39 : vector<1x16xf32>
    %41 = arith.divf %37, %40 : vector<1x16xf32>
    %c0_26 = arith.constant 0 : index
    %c0_27 = arith.constant 0 : index
    %42 = vector.load %arg11[%c0_26, %c0_27] : memref<2x16xf32, #tpu.memory_space<vmem>>, vector<1x16xf32>
    tpu.vector_store %arg11[%c0_26, %c0_27], %41 {strides = array<i32>} : memref<2x16xf32, #tpu.memory_space<vmem>>, vector<1x16xf32>,
    %43 = arith.divf %39, %40 : vector<1x16xf32>
    %c1 = arith.constant 1 : index
    %c0_28 = arith.constant 0 : index
    %44 = vector.load %arg11[%c1, %c0_28] : memref<2x16xf32, #tpu.memory_space<vmem>>, vector<1x16xf32>
    tpu.vector_store %arg11[%c1, %c0_28], %43 {strides = array<i32>} : memref<2x16xf32, #tpu.memory_space<vmem>>, vector<1x16xf32>,
    return
  }
  func.func @transform_0(%arg0: i32) -> (i32, i32) {
    %c0_i32 = arith.constant 0 : i32
    %c0_i32_0 = arith.constant 0 : i32
    return %arg0, %c0_i32 : i32, i32
  }
  func.func @transform_1(%arg0: i32) -> (i32, i32) {
    %c0_i32 = arith.constant 0 : i32
    %c0_i32_0 = arith.constant 0 : i32
    return %arg0, %c0_i32 : i32, i32
  }
  func.func @transform_2(%arg0: i32) -> (i32, i32) {
    %c0_i32 = arith.constant 0 : i32
    %c0_i32_0 = arith.constant 0 : i32
    %c0_i32_1 = arith.constant 0 : i32
    return %c0_i32, %c0_i32_0 : i32, i32
  }
  func.func @transform_3(%arg0: i32) -> (i32, i32) {
    %c0_i32 = arith.constant 0 : i32
    %c0_i32_0 = arith.constant 0 : i32
    %c0_i32_1 = arith.constant 0 : i32
    return %c0_i32, %c0_i32_0 : i32, i32
  }
  func.func @transform_4(%arg0: i32) -> (i32, i32) {
    %c0_i32 = arith.constant 0 : i32
    %c0_i32_0 = arith.constant 0 : i32
    %c0_i32_1 = arith.constant 0 : i32
    return %c0_i32, %c0_i32_0 : i32, i32
  }
  func.func @transform_5(%arg0: i32) -> (i32, i32) {
    %c0_i32 = arith.constant 0 : i32
    %c0_i32_0 = arith.constant 0 : i32
    %c0_i32_1 = arith.constant 0 : i32
    return %c0_i32, %c0_i32_0 : i32, i32
  }
  func.func @transform_6(%arg0: i32) -> (i32, i32) {
    %c0_i32 = arith.constant 0 : i32
    %c0_i32_0 = arith.constant 0 : i32
    %c0_i32_1 = arith.constant 0 : i32
    return %c0_i32, %c0_i32_0 : i32, i32
  }
  func.func @transform_7(%arg0: i32) -> (i32, i32) {
    %c0_i32 = arith.constant 0 : i32
    %c0_i32_0 = arith.constant 0 : i32
    %c0_i32_1 = arith.constant 0 : i32
    return %c0_i32, %c0_i32_0 : i32, i32
  }
  func.func @transform_8(%arg0: i32) -> (i32, i32) {
    %c0_i32 = arith.constant 0 : i32
    %c0_i32_0 = arith.constant 0 : i32
    %c0_i32_1 = arith.constant 0 : i32
    return %c0_i32, %c0_i32_0 : i32, i32
  }
  func.func @transform_9(%arg0: i32) -> (i32, i32) {
    %c0_i32 = arith.constant 0 : i32
    %c0_i32_0 = arith.constant 0 : i32
    %c0_i32_1 = arith.constant 0 : i32
    return %c0_i32, %c0_i32_0 : i32, i32
  }
  func.func @transform_10(%arg0: i32) -> (i32, i32) {
    %c0_i32 = arith.constant 0 : i32
    %c0_i32_0 = arith.constant 0 : i32
    return %c0_i32, %arg0 : i32, i32
  }
}

</mosaic_0001>

<llo_original>
// kernel: job_listing_classifier.1
$region0: #{job_listing_classifier.1}
  #allocation0 [shape = 'u32[]', space=smem, size = 0x4, offset = 0x4, fixed_abs, tag = 'smem constant byte address 0x4 - core index']
  #allocation1 [shape = 'u32[144,128]{1,0:T(1,128)}', space=vmem, size = 0x12000, scoped, tag = 'internal scratch']
  %s0 = inlined_call_operand.hbm [shape: f32[2,768], index: 0, kind: input, shape index: {}]
  %s1 = inlined_call_operand.hbm [shape: f32[2,16], index: 1, kind: input, shape index: {}]
  %s2 = inlined_call_operand.vmem [shape: bf16[16,128], index: 2, kind: input, shape index: {}]
  %s3 = inlined_call_operand.vmem [shape: f32[1,128], index: 3, kind: input, shape index: {}]
  %s4 = inlined_call_operand.hbm [shape: bf16[768,256], index: 4, kind: input, shape index: {}]
  %s5 = inlined_call_operand.hbm [shape: bf16[128,256], index: 5, kind: input, shape index: {}]
  %s6 = inlined_call_operand.vmem [shape: f32[1,256], index: 6, kind: input, shape index: {}]
  %s7 = inlined_call_operand.hbm [shape: bf16[256,128], index: 7, kind: input, shape index: {}]
  %s8 = inlined_call_operand.hbm [shape: f32[1,128], index: 8, kind: input, shape index: {}]
  %s9 = inlined_call_operand.vmem [shape: bf16[8,128], index: 9, kind: input, shape index: {}]
  %s10 = inlined_call_operand.vmem [shape: f32[2,16], index: 10, kind: output, shape index: {}]
  %s11 = sld [smem:[#allocation0]]
  $region74: #{job_listing_classifier.1} parent=0
    _
  %s13 = ssub.s32 1, %s11
  %s14 = scalar_select 0, %s13, %s11
  $region1: #{job_listing_classifier.1} parent=0
    #allocation2 [shape = 'u8[49152]{0}', space=vmem, size = 0xc000, scoped, tag = 'input window, operand 0, single buffered']
    #allocation3 [shape = 's32[1]{0}', space=sflag, size = 0x4, scoped, tag = 'scoped memory for job_listing_classifier.1']
    #allocation4 [shape = 'u8[8192]{0}', space=vmem, size = 0x2000, scoped, tag = 'input window, operand 1, single buffered']
    #allocation5 [shape = 's32[1]{0}', space=sflag, size = 0x4, scoped, tag = 'scoped memory for job_listing_classifier.1']
    #allocation6 [shape = 'u8[393216]{0}', space=vmem, size = 0x60000, scoped, tag = 'input window, operand 4, single buffered']
    #allocation7 [shape = 'u8[65536]{0}', space=vmem, size = 0x10000, scoped, tag = 'input window, operand 5, single buffered']
    #allocation8 [shape = 's32[1]{0}', space=sflag, size = 0x4, scoped, tag = 'scoped memory for job_listing_classifier.1']
    #allocation9 [shape = 'u8[65536]{0}', space=vmem, size = 0x10000, scoped, tag = 'input window, operand 7, single buffered']
    #allocation10 [shape = 'u8[512]{0}', space=vmem, size = 0x400, scoped, tag = 'input window, operand 8, single buffered']
    #allocation11 [shape = 's32[1]{0}', space=sflag, size = 0x4, scoped, tag = 'scoped memory for job_listing_classifier.1']
    %15 = vsyncpa [#allocation3], 0
    %16 = vsyncpa [#allocation5], 0
    %17 = vsyncpa [#allocation8], 0
    %18 = vsyncpa [#allocation11], 0
    // Predicated region
    $region2: #{job_listing_classifier.1} parent=1 // pred_check
      _
    $region3: #{job_listing_classifier.1} parent=1 // pred_check_branch
      %20 = sbr.rel (0) target = $region5
    $region4: #{job_listing_classifier.1} parent=1 // pred_region
      %s22 = ssub.s32 1536, 192
      %23 = vsyncadd [#allocation3], %s22
      %s24 = sshll.u32 [#allocation2], 4
      %s25 = int_to_ptr.vmem [resolvable:$true] %s24
      %30 = dma.hbm_to_vmem [thread:$0]  %s0, 192, %s25, [#allocation3], 192, 192, 12
    $region5: #{job_listing_classifier.1} parent=1 // pred_fallthru
      _
    // Predicated region
    $region6: #{job_listing_classifier.1} parent=1 // pred_check
      _
    $region7: #{job_listing_classifier.1} parent=1 // pred_check_branch
      %32 = sbr.rel (0) target = $region9
    $region8: #{job_listing_classifier.1} parent=1 // pred_region
      %s34 = ssub.s32 256, 32
      %35 = vsyncadd [#allocation5], %s34
      %s36 = sshll.u32 [#allocation4], 4
      %s37 = int_to_ptr.vmem [resolvable:$true] %s36
      %42 = dma.hbm_to_vmem [thread:$0]  %s1, 32, %s37, [#allocation5], 32, 32, 2
    $region9: #{job_listing_classifier.1} parent=1 // pred_fallthru
      _
    // Predicated region
    $region10: #{job_listing_classifier.1} parent=1 // pred_check
      _
    $region11: #{job_listing_classifier.1} parent=1 // pred_check_branch
      %44 = sbr.rel (0) target = $region13
    $region12: #{job_listing_classifier.1} parent=1 // pred_region
      _
    $region13: #{job_listing_classifier.1} parent=1 // pred_fallthru
      _
    // Predicated region
    $region14: #{job_listing_classifier.1} parent=1 // pred_check
      _
    $region15: #{job_listing_classifier.1} parent=1 // pred_check_branch
      %46 = sbr.rel (0) target = $region17
    $region16: #{job_listing_classifier.1} parent=1 // pred_region
      _
    $region17: #{job_listing_classifier.1} parent=1 // pred_fallthru
      _
    // Predicated region
    $region18: #{job_listing_classifier.1} parent=1 // pred_check
      _
    $region19: #{job_listing_classifier.1} parent=1 // pred_check_branch
      %48 = sbr.rel (0) target = $region21
    $region20: #{job_listing_classifier.1} parent=1 // pred_region
      %s50 = ssub.s32 12288, 12288
      %51 = vsyncadd [#allocation5], %s50
      %s52 = sshll.u32 [#allocation6], 4
      %s53 = int_to_ptr.vmem [resolvable:$true] %s52
      %58 = dma.hbm_to_vmem [thread:$0]  %s4, 12288, %s53, [#allocation5], 128, 128, 8
    $region21: #{job_listing_classifier.1} parent=1 // pred_fallthru
      _
    // Predicated region
    $region22: #{job_listing_classifier.1} parent=1 // pred_check
      _
    $region23: #{job_listing_classifier.1} parent=1 // pred_check_branch
      %60 = sbr.rel (0) target = $region25
    $region24: #{job_listing_classifier.1} parent=1 // pred_region
      %s62 = ssub.s32 2048, 2048
      %63 = vsyncadd [#allocation8], %s62
      %s64 = sshll.u32 [#allocation7], 4
      %s65 = int_to_ptr.vmem [resolvable:$true] %s64
      %70 = dma.hbm_to_vmem [thread:$0]  %s5, 2048, %s65, [#allocation8], 128, 128, 8
    $region25: #{job_listing_classifier.1} parent=1 // pred_fallthru
      _
    // Predicated region
    $region26: #{job_listing_classifier.1} parent=1 // pred_check
      _
    $region27: #{job_listing_classifier.1} parent=1 // pred_check_branch
      %72 = sbr.rel (0) target = $region29
    $region28: #{job_listing_classifier.1} parent=1 // pred_region
      _
    $region29: #{job_listing_classifier.1} parent=1 // pred_fallthru
      _
    // Predicated region
    $region30: #{job_listing_classifier.1} parent=1 // pred_check
      _
    $region31: #{job_listing_classifier.1} parent=1 // pred_check_branch
      %74 = sbr.rel (0) target = $region33
    $region32: #{job_listing_classifier.1} parent=1 // pred_region
      %s76 = ssub.s32 2048, 2048
      %77 = vsyncadd [#allocation8], %s76
      %s78 = sshll.u32 [#allocation9], 4
      %s79 = int_to_ptr.vmem [resolvable:$true] %s78
      %84 = dma.hbm_to_vmem [thread:$0]  %s7, 2048, %s79, [#allocation8], 64, 64, 4
    $region33: #{job_listing_classifier.1} parent=1 // pred_fallthru
      _
    // Predicated region
    $region34: #{job_listing_classifier.1} parent=1 // pred_check
      _
    $region35: #{job_listing_classifier.1} parent=1 // pred_check_branch
      %86 = sbr.rel (0) target = $region37
    $region36: #{job_listing_classifier.1} parent=1 // pred_region
      %s88 = ssub.s32 16, 16
      %89 = vsyncadd [#allocation11], %s88
      %s91 = sshll.u32 [#allocation10], 4
      %s92 = int_to_ptr.vmem [resolvable:$true] %s91
      %94 = dma.hbm_to_vmem [thread:$0]  %s8, 16, %s92, [#allocation11]
    $region37: #{job_listing_classifier.1} parent=1 // pred_fallthru
      _
    // Predicated region
    $region38: #{job_listing_classifier.1} parent=1 // pred_check
      _
    $region39: #{job_listing_classifier.1} parent=1 // pred_check_branch
      %96 = sbr.rel (0) target = $region41
    $region40: #{job_listing_classifier.1} parent=1 // pred_region
      _
    $region41: #{job_listing_classifier.1} parent=1 // pred_fallthru
      _
    // Predicated region
    $region42: #{job_listing_classifier.1} parent=1 // pred_check
      _
    $region43: #{job_listing_classifier.1} parent=1 // pred_check_branch
      %98 = sbr.rel (0) target = $region45
    $region44: #{job_listing_classifier.1} parent=1 // pred_region
      %99 = dma.done [#allocation3], 1536
    $region45: #{job_listing_classifier.1} parent=1 // pred_fallthru
      _
    // Predicated region
    $region46: #{job_listing_classifier.1} parent=1 // pred_check
      _
    $region47: #{job_listing_classifier.1} parent=1 // pred_check_branch
      %101 = sbr.rel (0) target = $region49
    $region48: #{job_listing_classifier.1} parent=1 // pred_region
      %102 = dma.done [#allocation5], 256
    $region49: #{job_listing_classifier.1} parent=1 // pred_fallthru
      _
    // Predicated region
    $region50: #{job_listing_classifier.1} parent=1 // pred_check
      _
    $region51: #{job_listing_classifier.1} parent=1 // pred_check_branch
      %104 = sbr.rel (0) target = $region53
    $region52: #{job_listing_classifier.1} parent=1 // pred_region
      %105 = dma.done [#allocation5], 12288
    $region53: #{job_listing_classifier.1} parent=1 // pred_fallthru
      _
    // Predicated region
    $region54: #{job_listing_classifier.1} parent=1 // pred_check
      _
    $region55: #{job_listing_classifier.1} parent=1 // pred_check_branch
      %107 = sbr.rel (0) target = $region57
    $region56: #{job_listing_classifier.1} parent=1 // pred_region
      %108 = dma.done [#allocation8], 2048
    $region57: #{job_listing_classifier.1} parent=1 // pred_fallthru
      _
    // Predicated region
    $region58: #{job_listing_classifier.1} parent=1 // pred_check
      _
    $region59: #{job_listing_classifier.1} parent=1 // pred_check_branch
      %110 = sbr.rel (0) target = $region61
    $region60: #{job_listing_classifier.1} parent=1 // pred_region
      %111 = dma.done [#allocation8], 2048
    $region61: #{job_listing_classifier.1} parent=1 // pred_fallthru
      _
    // Predicated region
    $region62: #{job_listing_classifier.1} parent=1 // pred_check
      _
    $region63: #{job_listing_classifier.1} parent=1 // pred_check_branch
      %113 = sbr.rel (0) target = $region65
    $region64: #{job_listing_classifier.1} parent=1 // pred_region
      %114 = dma.done [#allocation11], 16
    $region65: #{job_listing_classifier.1} parent=1 // pred_fallthru
      _
    %v116 = vld [vmem:[#allocation2] sm:$0xff]
    %v117 = vld [vmem:[#allocation2 + $0x8] sm:$0xf]
    %v118 = vld [vmem:[#allocation2 + $0xc] sm:$0xff]
    %v119 = vld [vmem:[#allocation2 + $0x14] sm:$0xf]
    %v120 = vld [vmem:[#allocation2 + $0x18] sm:$0xff]
    %v121 = vld [vmem:[#allocation2 + $0x20] sm:$0xf]
    %v122 = vld [vmem:[#allocation2 + $0x24] sm:$0xff]
    %v123 = vld [vmem:[#allocation2 + $0x2c] sm:$0xf]
    %v124 = vld [vmem:[#allocation2 + $0x30] sm:$0xff]
    %v125 = vld [vmem:[#allocation2 + $0x38] sm:$0xf]
    %v126 = vld [vmem:[#allocation2 + $0x3c] sm:$0xff]
    %v127 = vld [vmem:[#allocation2 + $0x44] sm:$0xf]
    %v128 = vld [vmem:[#allocation2 + $0x48] sm:$0xff]
    %v129 = vld [vmem:[#allocation2 + $0x50] sm:$0xf]
    %v130 = vld [vmem:[#allocation2 + $0x54] sm:$0xff]
    %v131 = vld [vmem:[#allocation2 + $0x5c] sm:$0xf]
    %v148 = vcombine.low %v116, %v118
    %v149 = vcombine.high %v116, %v118
    %v150 = vcombine.low %v120, %v122
    %v151 = vcombine.high %v120, %v122
    %v153 = vunpack.c.l.s4 1983009808
    %v154 = vunpack.c.0.s8 %v153
    %v155 = vlaneseq
    %v156 = vshrl.u32 %v155, 7
    %v157 = vsub.s32 %v154, %v156
    %v158 = vrot.slane %v148, %v157
    %v160 = vunpack.c.l.s4 1983009808
    %v161 = vunpack.c.0.s8 %v160
    %v162 = vlaneseq
    %v163 = vshrl.u32 %v162, 7
    %v164 = vsub.s32 %v161, %v163
    %v165 = vrot.slane %v149, %v164
    %v167 = vunpack.c.l.s4 1983009808
    %v168 = vunpack.c.0.s8 %v167
    %v169 = vlaneseq
    %v170 = vshrl.u32 %v169, 7
    %v171 = vsub.s32 %v168, %v170
    %v172 = vrot.slane %v150, %v171
    %v174 = vunpack.c.l.s4 1983009808
    %v175 = vunpack.c.0.s8 %v174
    %v176 = vlaneseq
    %v177 = vshrl.u32 %v176, 7
    %v178 = vsub.s32 %v175, %v177
    %v179 = vrot.slane %v151, %v178
    %v180 = vcombine.low %v158, %v172
    %v181 = vcombine.high %v158, %v172
    %v182 = vcombine.low %v165, %v179
    %v183 = vcombine.high %v165, %v179
    %v184 = vcombine.low %v117, %v119
    %v185 = vcombine.low %v121, %v123
    %v187 = vunpack.c.l.s4 1983009808
    %v188 = vunpack.c.0.s8 %v187
    %v189 = vlaneseq
    %v190 = vshrl.u32 %v189, 7
    %v191 = vsub.s32 %v188, %v190
    %v192 = vrot.slane %v184, %v191
    %v194 = vunpack.c.l.s4 1983009808
    %v195 = vunpack.c.0.s8 %v194
    %v196 = vlaneseq
    %v197 = vshrl.u32 %v196, 7
    %v198 = vsub.s32 %v195, %v197
    %v199 = vrot.slane %v185, %v198
    %v200 = vcombine.low %v192, %v199
    %v201 = vcombine.high %v192, %v199
    %v202 = vcombine.low %v124, %v126
    %v203 = vcombine.high %v124, %v126
    %v204 = vcombine.low %v128, %v130
    %v205 = vcombine.high %v128, %v130
    %v207 = vunpack.c.l.s4 1983009808
    %v208 = vunpack.c.0.s8 %v207
    %v209 = vlaneseq
    %v210 = vshrl.u32 %v209, 7
    %v211 = vsub.s32 %v208, %v210
    %v212 = vrot.slane %v202, %v211
    %v214 = vunpack.c.l.s4 1983009808
    %v215 = vunpack.c.0.s8 %v214
    %v216 = vlaneseq
    %v217 = vshrl.u32 %v216, 7
    %v218 = vsub.s32 %v215, %v217
    %v219 = vrot.slane %v203, %v218
    %v221 = vunpack.c.l.s4 1983009808
    %v222 = vunpack.c.0.s8 %v221
    %v223 = vlaneseq
    %v224 = vshrl.u32 %v223, 7
    %v225 = vsub.s32 %v222, %v224
    %v226 = vrot.slane %v204, %v225
    %v228 = vunpack.c.l.s4 1983009808
    %v229 = vunpack.c.0.s8 %v228
    %v230 = vlaneseq
    %v231 = vshrl.u32 %v230, 7
    %v232 = vsub.s32 %v229, %v231
    %v233 = vrot.slane %v205, %v232
    %v234 = vcombine.low %v212, %v226
    %v235 = vcombine.high %v212, %v226
    %v236 = vcombine.low %v219, %v233
    %v237 = vcombine.high %v219, %v233
    %v238 = vcombine.low %v125, %v127
    %v239 = vcombine.low %v129, %v131
    %v241 = vunpack.c.l.s4 1983009808
    %v242 = vunpack.c.0.s8 %v241
    %v243 = vlaneseq
    %v244 = vshrl.u32 %v243, 7
    %v245 = vsub.s32 %v242, %v244
    %v246 = vrot.slane %v238, %v245
    %v248 = vunpack.c.l.s4 1983009808
    %v249 = vunpack.c.0.s8 %v248
    %v250 = vlaneseq
    %v251 = vshrl.u32 %v250, 7
    %v252 = vsub.s32 %v249, %v251
    %v253 = vrot.slane %v239, %v252
    %v254 = vcombine.low %v246, %v253
    %v255 = vcombine.high %v246, %v253
    %v268 = vpack.c.bf16 %v234, %v180
    %v269 = vpack.c.bf16 %v235, %v181
    %v270 = vpack.c.bf16 %v236, %v182
    %v271 = vpack.c.bf16 %v237, %v183
    %v272 = vpack.c.bf16 %v254, %v200
    %v273 = vpack.c.bf16 %v255, %v201
    %v274 = vld [vmem:[#allocation4] sm:$0xff]
    %v275 = vld [vmem:[#allocation4 + $0x8] sm:$0xff]
    %v276 = vpack.c.bf16 %v275, %v274
    %v277 = vld [vmem:[%s2] sm:$0xf]
    %v278 = vld [vmem:[%s2 + $0x4] sm:$0xf]
    %v279 = vld [vmem:[%s3] sm:$0x1]
    %v281 = vlaneseq
    %v282 = vshrl.u32 %v281, 7
    %v283 = vsub.s32 0, %v282
    %v284 = vrot.slane %v279, %v283
    %v288 = vunpack.c.l.b16 %v277
    %v289 = vunpack.c.l.b16 %v278
    %v290 = vpack.c.b16 %v289, %v288
    %vm292 = vcmask 130048
    %v294 = vsel %vm292, %v276, 0
    %296 = vmatprep.subr.bf16.mxu0 0
    %297 = vmatpush1.bf16.msra.mxu0 0
    %298 = vmatprep.subr.bf16.mxu0 0
    %299 = vmatpush1.bf16.msra.mxu0 0
    %300 = vmatprep.subr.bf16.mxu0 0
    %301 = vmatpush1.bf16.msra.mxu0 0
    %302 = vmatprep.subr.bf16.mxu0 0
    %303 = vmatpush1.bf16.msra.mxu0 0
    %304 = vmatprep.subr.bf16.mxu0 0
    %305 = vmatpush1.bf16.msra.mxu0 0
    %306 = vmatprep.subr.bf16.mxu0 0
    %307 = vmatpush1.bf16.msra.mxu0 0
    %308 = vmatprep.subr.bf16.mxu0 0
    %309 = vmatpush1.bf16.msra.mxu0 0
    %310 = vmatprep.subr.bf16.mxu0 0
    %311 = vmatpush1.bf16.msra.mxu0 %v290
    %312 = vmatprep.subr.bf16.mxu0 0
    %313 = vmatpush2.bf16.msra.mxu0 0
    %314 = vmatprep.subr.bf16.mxu0 0
    %315 = vmatpush2.bf16.msra.mxu0 0
    %316 = vmatprep.subr.bf16.mxu0 0
    %317 = vmatpush2.bf16.msra.mxu0 0
    %318 = vmatprep.subr.bf16.mxu0 0
    %319 = vmatpush2.bf16.msra.mxu0 0
    %320 = vmatprep.subr.bf16.mxu0 0
    %321 = vmatpush2.bf16.msra.mxu0 0
    %322 = vmatprep.subr.bf16.mxu0 0
    %323 = vmatpush2.bf16.msra.mxu0 0
    %324 = vmatprep.subr.bf16.mxu0 0
    %325 = vmatpush2.bf16.msra.mxu0 0
    %326 = vmatprep.subr.bf16.mxu0 0
    %327 = vmatpush2.bf16.msra.mxu0 0
    %328 = vmatprep.mubr.bf16.mxu0 0
    %329 = vmatmul.mubr.bf16.gmra.mxu0 %v294
    %v330 = vpop.f32.mrf.mxu0
    %v331 = vadd.f32 %v284, %v330
    %v332 = vpop.f32.mrf.mxu0
    %v333 = vpop.f32.mrf.mxu0
    %v334 = vadd.f32 %v284, %v333
    %v335 = vpop.f32.mrf.mxu0
    %336 = vdwg.mxu0
    %v337 = vmax.f32 %v331, 0.0
    %v338 = vmax.f32 %v334, 0.0
    %v339 = vld [vmem:[#allocation6] sm:$0xff]
    %v340 = vld [vmem:[#allocation6 + $0x8] sm:$0xff]
    %v341 = vld [vmem:[#allocation6 + $0x10] sm:$0xff]
    %v342 = vld [vmem:[#allocation6 + $0x18] sm:$0xff]
    %v343 = vld [vmem:[#allocation6 + $0x20] sm:$0xff]
    %v344 = vld [vmem:[#allocation6 + $0x28] sm:$0xff]
    %v345 = vld [vmem:[#allocation6 + $0x30] sm:$0xff]
    %v346 = vld [vmem:[#allocation6 + $0x38] sm:$0xff]
    %v347 = vld [vmem:[#allocation6 + $0x40] sm:$0xff]
    %v348 = vld [vmem:[#allocation6 + $0x48] sm:$0xff]
    %v349 = vld [vmem:[#allocation6 + $0x50] sm:$0xff]
    %v350 = vld [vmem:[#allocation6 + $0x58] sm:$0xff]
    %v351 = vld [vmem:[#allocation6 + $0x60] sm:$0xff]
    %v352 = vld [vmem:[#allocation6 + $0x68] sm:$0xff]
    %v353 = vld [vmem:[#allocation6 + $0x70] sm:$0xff]
    %v354 = vld [vmem:[#allocation6 + $0x78] sm:$0xff]
    %v355 = vld [vmem:[#allocation6 + $0x80] sm:$0xff]
    %v356 = vld [vmem:[#allocation6 + $0x88] sm:$0xff]
    %v357 = vld [vmem:[#allocation6 + $0x90] sm:$0xff]
    %v358 = vld [vmem:[#allocation6 + $0x98] sm:$0xff]
    %v359 = vld [vmem:[#allocation6 + $0xa0] sm:$0xff]
    %v360 = vld [vmem:[#allocation6 + $0xa8] sm:$0xff]
    %v361 = vld [vmem:[#allocation6 + $0xb0] sm:$0xff]
    %v362 = vld [vmem:[#allocation6 + $0xb8] sm:$0xff]
    %v363 = vld [vmem:[#allocation6 + $0xc0] sm:$0xff]
    %v364 = vld [vmem:[#allocation6 + $0xc8] sm:$0xff]
    %v365 = vld [vmem:[#allocation6 + $0xd0] sm:$0xff]
    %v366 = vld [vmem:[#allocation6 + $0xd8] sm:$0xff]
    %v367 = vld [vmem:[#allocation6 + $0xe0] sm:$0xff]
    %v368 = vld [vmem:[#allocation6 + $0xe8] sm:$0xff]
    %v369 = vld [vmem:[#allocation6 + $0xf0] sm:$0xff]
    %v370 = vld [vmem:[#allocation6 + $0xf8] sm:$0xff]
    %v371 = vld [vmem:[#allocation6 + $0x100] sm:$0xff]
    %v372 = vld [vmem:[#allocation6 + $0x108] sm:$0xff]
    %v373 = vld [vmem:[#allocation6 + $0x110] sm:$0xff]
    %v374 = vld [vmem:[#allocation6 + $0x118] sm:$0xff]
    %v375 = vld [vmem:[#allocation6 + $0x120] sm:$0xff]
    %v376 = vld [vmem:[#allocation6 + $0x128] sm:$0xff]
    %v377 = vld [vmem:[#allocation6 + $0x130] sm:$0xff]
    %v378 = vld [vmem:[#allocation6 + $0x138] sm:$0xff]
    %v379 = vld [vmem:[#allocation6 + $0x140] sm:$0xff]
    %v380 = vld [vmem:[#allocation6 + $0x148] sm:$0xff]
    %v381 = vld [vmem:[#allocation6 + $0x150] sm:$0xff]
    %v382 = vld [vmem:[#allocation6 + $0x158] sm:$0xff]
    %v383 = vld [vmem:[#allocation6 + $0x160] sm:$0xff]
    %v384 = vld [vmem:[#allocation6 + $0x168] sm:$0xff]
    %v385 = vld [vmem:[#allocation6 + $0x170] sm:$0xff]
    %v386 = vld [vmem:[#allocation6 + $0x178] sm:$0xff]
    %v387 = vld [vmem:[#allocation6 + $0x180] sm:$0xff]
    %v388 = vld [vmem:[#allocation6 + $0x188] sm:$0xff]
    %v389 = vld [vmem:[#allocation6 + $0x190] sm:$0xff]
    %v390 = vld [vmem:[#allocation6 + $0x198] sm:$0xff]
    %v391 = vld [vmem:[#allocation6 + $0x1a0] sm:$0xff]
    %v392 = vld [vmem:[#allocation6 + $0x1a8] sm:$0xff]
    %v393 = vld [vmem:[#allocation6 + $0x1b0] sm:$0xff]
    %v394 = vld [vmem:[#allocation6 + $0x1b8] sm:$0xff]
    %v395 = vld [vmem:[#allocation6 + $0x1c0] sm:$0xff]
    %v396 = vld [vmem:[#allocation6 + $0x1c8] sm:$0xff]
    %v397 = vld [vmem:[#allocation6 + $0x1d0] sm:$0xff]
    %v398 = vld [vmem:[#allocation6 + $0x1d8] sm:$0xff]
    %v399 = vld [vmem:[#allocation6 + $0x1e0] sm:$0xff]
    %v400 = vld [vmem:[#allocation6 + $0x1e8] sm:$0xff]
    %v401 = vld [vmem:[#allocation6 + $0x1f0] sm:$0xff]
    %v402 = vld [vmem:[#allocation6 + $0x1f8] sm:$0xff]
    %v403 = vld [vmem:[#allocation6 + $0x200] sm:$0xff]
    %v404 = vld [vmem:[#allocation6 + $0x208] sm:$0xff]
    %v405 = vld [vmem:[#allocation6 + $0x210] sm:$0xff]
    %v406 = vld [vmem:[#allocation6 + $0x218] sm:$0xff]
    %v407 = vld [vmem:[#allocation6 + $0x220] sm:$0xff]
    %v408 = vld [vmem:[#allocation6 + $0x228] sm:$0xff]
    %v409 = vld [vmem:[#allocation6 + $0x230] sm:$0xff]
    %v410 = vld [vmem:[#allocation6 + $0x238] sm:$0xff]
    %v411 = vld [vmem:[#allocation6 + $0x240] sm:$0xff]
    %v412 = vld [vmem:[#allocation6 + $0x248] sm:$0xff]
    %v413 = vld [vmem:[#allocation6 + $0x250] sm:$0xff]
    %v414 = vld [vmem:[#allocation6 + $0x258] sm:$0xff]
    %v415 = vld [vmem:[#allocation6 + $0x260] sm:$0xff]
    %v416 = vld [vmem:[#allocation6 + $0x268] sm:$0xff]
    %v417 = vld [vmem:[#allocation6 + $0x270] sm:$0xff]
    %v418 = vld [vmem:[#allocation6 + $0x278] sm:$0xff]
    %v419 = vld [vmem:[#allocation6 + $0x280] sm:$0xff]
    %v420 = vld [vmem:[#allocation6 + $0x288] sm:$0xff]
    %v421 = vld [vmem:[#allocation6 + $0x290] sm:$0xff]
    %v422 = vld [vmem:[#allocation6 + $0x298] sm:$0xff]
    %v423 = vld [vmem:[#allocation6 + $0x2a0] sm:$0xff]
    %v424 = vld [vmem:[#allocation6 + $0x2a8] sm:$0xff]
    %v425 = vld [vmem:[#allocation6 + $0x2b0] sm:$0xff]
    %v426 = vld [vmem:[#allocation6 + $0x2b8] sm:$0xff]
    %v427 = vld [vmem:[#allocation6 + $0x2c0] sm:$0xff]
    %v428 = vld [vmem:[#allocation6 + $0x2c8] sm:$0xff]
    %v429 = vld [vmem:[#allocation6 + $0x2d0] sm:$0xff]
    %v430 = vld [vmem:[#allocation6 + $0x2d8] sm:$0xff]
    %v431 = vld [vmem:[#allocation6 + $0x2e0] sm:$0xff]
    %v432 = vld [vmem:[#allocation6 + $0x2e8] sm:$0xff]
    %v433 = vld [vmem:[#allocation6 + $0x2f0] sm:$0xff]
    %v434 = vld [vmem:[#allocation6 + $0x2f8] sm:$0xff]
    %v435 = vpack.c.bf16 %v338, %v337
    %v436 = vld [vmem:[#allocation7] sm:$0xff]
    %v437 = vld [vmem:[#allocation7 + $0x8] sm:$0xff]
    %v438 = vld [vmem:[#allocation7 + $0x10] sm:$0xff]
    %v439 = vld [vmem:[#allocation7 + $0x18] sm:$0xff]
    %v440 = vld [vmem:[#allocation7 + $0x20] sm:$0xff]
    %v441 = vld [vmem:[#allocation7 + $0x28] sm:$0xff]
    %v442 = vld [vmem:[#allocation7 + $0x30] sm:$0xff]
    %v443 = vld [vmem:[#allocation7 + $0x38] sm:$0xff]
    %v444 = vld [vmem:[#allocation7 + $0x40] sm:$0xff]
    %v445 = vld [vmem:[#allocation7 + $0x48] sm:$0xff]
    %v446 = vld [vmem:[#allocation7 + $0x50] sm:$0xff]
    %v447 = vld [vmem:[#allocation7 + $0x58] sm:$0xff]
    %v448 = vld [vmem:[#allocation7 + $0x60] sm:$0xff]
    %v449 = vld [vmem:[#allocation7 + $0x68] sm:$0xff]
    %v450 = vld [vmem:[#allocation7 + $0x70] sm:$0xff]
    %v451 = vld [vmem:[#allocation7 + $0x78] sm:$0xff]
    %v468 = vunpack.c.l.b16 %v436
    %v469 = vunpack.c.h.b16 %v436
    %v470 = vunpack.c.l.b16 %v437
    %v471 = vunpack.c.h.b16 %v437
    %v472 = vunpack.c.l.b16 %v438
    %v473 = vunpack.c.h.b16 %v438
    %v474 = vunpack.c.l.b16 %v439
    %v475 = vunpack.c.h.b16 %v439
    %v476 = vunpack.c.l.b16 %v440
    %v477 = vunpack.c.h.b16 %v440
    %v478 = vunpack.c.l.b16 %v441
    %v479 = vunpack.c.h.b16 %v441
    %v480 = vunpack.c.l.b16 %v442
    %v481 = vunpack.c.h.b16 %v442
    %v482 = vunpack.c.l.b16 %v443
    %v483 = vunpack.c.h.b16 %v443
    %v484 = vunpack.c.l.b16 %v444
    %v485 = vunpack.c.h.b16 %v444
    %v486 = vunpack.c.l.b16 %v445
    %v487 = vunpack.c.h.b16 %v445
    %v488 = vunpack.c.l.b16 %v446
    %v489 = vunpack.c.h.b16 %v446
    %v490 = vunpack.c.l.b16 %v447
    %v491 = vunpack.c.h.b16 %v447
    %v492 = vunpack.c.l.b16 %v448
    %v493 = vunpack.c.h.b16 %v448
    %v494 = vunpack.c.l.b16 %v449
    %v495 = vunpack.c.h.b16 %v449
    %v496 = vunpack.c.l.b16 %v450
    %v497 = vunpack.c.h.b16 %v450
    %v498 = vunpack.c.l.b16 %v451
    %v499 = vunpack.c.h.b16 %v451
    %v500 = vpack.c.b16 %v470, %v468
    %v501 = vpack.c.b16 %v471, %v469
    %v502 = vpack.c.b16 %v474, %v472
    %v503 = vpack.c.b16 %v475, %v473
    %v504 = vpack.c.b16 %v478, %v476
    %v505 = vpack.c.b16 %v479, %v477
    %v506 = vpack.c.b16 %v482, %v480
    %v507 = vpack.c.b16 %v483, %v481
    %v508 = vpack.c.b16 %v486, %v484
    %v509 = vpack.c.b16 %v487, %v485
    %v510 = vpack.c.b16 %v490, %v488
    %v511 = vpack.c.b16 %v491, %v489
    %v512 = vpack.c.b16 %v494, %v492
    %v513 = vpack.c.b16 %v495, %v493
    %v514 = vpack.c.b16 %v498, %v496
    %v515 = vpack.c.b16 %v499, %v497
    %532 = vmatprep.subr.bf16.mxu0 %v515
    %533 = vmatpush1.bf16.msra.mxu0 %v514
    %534 = vmatprep.subr.bf16.mxu0 %v513
    %535 = vmatpush1.bf16.msra.mxu0 %v512
    %536 = vmatprep.subr.bf16.mxu0 %v511
    %537 = vmatpush1.bf16.msra.mxu0 %v510
    %538 = vmatprep.subr.bf16.mxu0 %v509
    %539 = vmatpush1.bf16.msra.mxu0 %v508
    %540 = vmatprep.subr.bf16.mxu0 %v507
    %541 = vmatpush1.bf16.msra.mxu0 %v506
    %542 = vmatprep.subr.bf16.mxu0 %v505
    %543 = vmatpush1.bf16.msra.mxu0 %v504
    %544 = vmatprep.subr.bf16.mxu0 %v503
    %545 = vmatpush1.bf16.msra.mxu0 %v502
    %546 = vmatprep.subr.bf16.mxu0 %v501
    %547 = vmatpush1.bf16.msra.mxu0 %v500
    %548 = vmatprep.subr.bf16.mxu0 0
    %549 = vmatpush2.bf16.msra.mxu0 0
    %550 = vmatprep.subr.bf16.mxu0 0
    %551 = vmatpush2.bf16.msra.mxu0 0
    %552 = vmatprep.subr.bf16.mxu0 0
    %553 = vmatpush2.bf16.msra.mxu0 0
    %554 = vmatprep.subr.bf16.mxu0 0
    %555 = vmatpush2.bf16.msra.mxu0 0
    %556 = vmatprep.subr.bf16.mxu0 0
    %557 = vmatpush2.bf16.msra.mxu0 0
    %558 = vmatprep.subr.bf16.mxu0 0
    %559 = vmatpush2.bf16.msra.mxu0 0
    %560 = vmatprep.subr.bf16.mxu0 0
    %561 = vmatpush2.bf16.msra.mxu0 0
    %562 = vmatprep.subr.bf16.mxu0 0
    %563 = vmatpush2.bf16.msra.mxu0 0
    %564 = vmatprep.mubr.bf16.mxu0 0
    %565 = vmatmul.mubr.bf16.gmra.mxu0 %v435
    %v566 = vpop.f32.mrf.mxu0
    %v567 = vadd.f32 0.0, %v566
    %v568 = vpop.f32.mrf.mxu0
    %v569 = vadd.f32 0.0, %v568
    %v570 = vpop.f32.mrf.mxu0
    %v571 = vadd.f32 0.0, %v570
    %v572 = vpop.f32.mrf.mxu0
    %v573 = vadd.f32 0.0, %v572
    %574 = vdwg.mxu0
    %v671 = vunpack.c.l.b16 %v339
    %v672 = vunpack.c.h.b16 %v339
    %v673 = vunpack.c.l.b16 %v340
    %v674 = vunpack.c.h.b16 %v340
    %v675 = vunpack.c.l.b16 %v341
    %v676 = vunpack.c.h.b16 %v341
    %v677 = vunpack.c.l.b16 %v342
    %v678 = vunpack.c.h.b16 %v342
    %v679 = vunpack.c.l.b16 %v343
    %v680 = vunpack.c.h.b16 %v343
    %v681 = vunpack.c.l.b16 %v344
    %v682 = vunpack.c.h.b16 %v344
    %v683 = vunpack.c.l.b16 %v345
    %v684 = vunpack.c.h.b16 %v345
    %v685 = vunpack.c.l.b16 %v346
    %v686 = vunpack.c.h.b16 %v346
    %v687 = vunpack.c.l.b16 %v347
    %v688 = vunpack.c.h.b16 %v347
    %v689 = vunpack.c.l.b16 %v348
    %v690 = vunpack.c.h.b16 %v348
    %v691 = vunpack.c.l.b16 %v349
    %v692 = vunpack.c.h.b16 %v349
    %v693 = vunpack.c.l.b16 %v350
    %v694 = vunpack.c.h.b16 %v350
    %v695 = vunpack.c.l.b16 %v351
    %v696 = vunpack.c.h.b16 %v351
    %v697 = vunpack.c.l.b16 %v352
    %v698 = vunpack.c.h.b16 %v352
    %v699 = vunpack.c.l.b16 %v353
    %v700 = vunpack.c.h.b16 %v353
    %v701 = vunpack.c.l.b16 %v354
    %v702 = vunpack.c.h.b16 %v354
    %v703 = vunpack.c.l.b16 %v355
    %v704 = vunpack.c.h.b16 %v355
    %v705 = vunpack.c.l.b16 %v356
    %v706 = vunpack.c.h.b16 %v356
    %v707 = vunpack.c.l.b16 %v357
    %v708 = vunpack.c.h.b16 %v357
    %v709 = vunpack.c.l.b16 %v358
    %v710 = vunpack.c.h.b16 %v358
    %v711 = vunpack.c.l.b16 %v359
    %v712 = vunpack.c.h.b16 %v359
    %v713 = vunpack.c.l.b16 %v360
    %v714 = vunpack.c.h.b16 %v360
    %v715 = vunpack.c.l.b16 %v361
    %v716 = vunpack.c.h.b16 %v361
    %v717 = vunpack.c.l.b16 %v362
    %v718 = vunpack.c.h.b16 %v362
    %v719 = vunpack.c.l.b16 %v363
    %v720 = vunpack.c.h.b16 %v363
    %v721 = vunpack.c.l.b16 %v364
    %v722 = vunpack.c.h.b16 %v364
    %v723 = vunpack.c.l.b16 %v365
    %v724 = vunpack.c.h.b16 %v365
    %v725 = vunpack.c.l.b16 %v366
    %v726 = vunpack.c.h.b16 %v366
    %v727 = vunpack.c.l.b16 %v367
    %v728 = vunpack.c.h.b16 %v367
    %v729 = vunpack.c.l.b16 %v368
    %v730 = vunpack.c.h.b16 %v368
    %v731 = vunpack.c.l.b16 %v369
    %v732 = vunpack.c.h.b16 %v369
    %v733 = vunpack.c.l.b16 %v370
    %v734 = vunpack.c.h.b16 %v370
    %v735 = vunpack.c.l.b16 %v371
    %v736 = vunpack.c.h.b16 %v371
    %v737 = vunpack.c.l.b16 %v372
    %v738 = vunpack.c.h.b16 %v372
    %v739 = vunpack.c.l.b16 %v373
    %v740 = vunpack.c.h.b16 %v373
    %v741 = vunpack.c.l.b16 %v374
    %v742 = vunpack.c.h.b16 %v374
    %v743 = vunpack.c.l.b16 %v375
    %v744 = vunpack.c.h.b16 %v375
    %v745 = vunpack.c.l.b16 %v376
    %v746 = vunpack.c.h.b16 %v376
    %v747 = vunpack.c.l.b16 %v377
    %v748 = vunpack.c.h.b16 %v377
    %v749 = vunpack.c.l.b16 %v378
    %v750 = vunpack.c.h.b16 %v378
    %v751 = vunpack.c.l.b16 %v379
    %v752 = vunpack.c.h.b16 %v379
    %v753 = vunpack.c.l.b16 %v380
    %v754 = vunpack.c.h.b16 %v380
    %v755 = vunpack.c.l.b16 %v381
    %v756 = vunpack.c.h.b16 %v381
    %v757 = vunpack.c.l.b16 %v382
    %v758 = vunpack.c.h.b16 %v382
    %v759 = vunpack.c.l.b16 %v383
    %v760 = vunpack.c.h.b16 %v383
    %v761 = vunpack.c.l.b16 %v384
    %v762 = vunpack.c.h.b16 %v384
    %v763 = vunpack.c.l.b16 %v385
    %v764 = vunpack.c.h.b16 %v385
    %v765 = vunpack.c.l.b16 %v386
    %v766 = vunpack.c.h.b16 %v386
    %v767 = vunpack.c.l.b16 %v387
    %v768 = vunpack.c.h.b16 %v387
    %v769 = vunpack.c.l.b16 %v388
    %v770 = vunpack.c.h.b16 %v388
    %v771 = vunpack.c.l.b16 %v389
    %v772 = vunpack.c.h.b16 %v389
    %v773 = vunpack.c.l.b16 %v390
    %v774 = vunpack.c.h.b16 %v390
    %v775 = vunpack.c.l.b16 %v391
    %v776 = vunpack.c.h.b16 %v391
    %v777 = vunpack.c.l.b16 %v392
    %v778 = vunpack.c.h.b16 %v392
    %v779 = vunpack.c.l.b16 %v393
    %v780 = vunpack.c.h.b16 %v393
    %v781 = vunpack.c.l.b16 %v394
    %v782 = vunpack.c.h.b16 %v394
    %v783 = vunpack.c.l.b16 %v395
    %v784 = vunpack.c.h.b16 %v395
    %v785 = vunpack.c.l.b16 %v396
    %v786 = vunpack.c.h.b16 %v396
    %v787 = vunpack.c.l.b16 %v397
    %v788 = vunpack.c.h.b16 %v397
    %v789 = vunpack.c.l.b16 %v398
    %v790 = vunpack.c.h.b16 %v398
    %v791 = vunpack.c.l.b16 %v399
    %v792 = vunpack.c.h.b16 %v399
    %v793 = vunpack.c.l.b16 %v400
    %v794 = vunpack.c.h.b16 %v400
    %v795 = vunpack.c.l.b16 %v401
    %v796 = vunpack.c.h.b16 %v401
    %v797 = vunpack.c.l.b16 %v402
    %v798 = vunpack.c.h.b16 %v402
    %v799 = vunpack.c.l.b16 %v403
    %v800 = vunpack.c.h.b16 %v403
    %v801 = vunpack.c.l.b16 %v404
    %v802 = vunpack.c.h.b16 %v404
    %v803 = vunpack.c.l.b16 %v405
    %v804 = vunpack.c.h.b16 %v405
    %v805 = vunpack.c.l.b16 %v406
    %v806 = vunpack.c.h.b16 %v406
    %v807 = vunpack.c.l.b16 %v407
    %v808 = vunpack.c.h.b16 %v407
    %v809 = vunpack.c.l.b16 %v408
    %v810 = vunpack.c.h.b16 %v408
    %v811 = vunpack.c.l.b16 %v409
    %v812 = vunpack.c.h.b16 %v409
    %v813 = vunpack.c.l.b16 %v410
    %v814 = vunpack.c.h.b16 %v410
    %v815 = vunpack.c.l.b16 %v411
    %v816 = vunpack.c.h.b16 %v411
    %v817 = vunpack.c.l.b16 %v412
    %v818 = vunpack.c.h.b16 %v412
    %v819 = vunpack.c.l.b16 %v413
    %v820 = vunpack.c.h.b16 %v413
    %v821 = vunpack.c.l.b16 %v414
    %v822 = vunpack.c.h.b16 %v414
    %v823 = vunpack.c.l.b16 %v415
    %v824 = vunpack.c.h.b16 %v415
    %v825 = vunpack.c.l.b16 %v416
    %v826 = vunpack.c.h.b16 %v416
    %v827 = vunpack.c.l.b16 %v417
    %v828 = vunpack.c.h.b16 %v417
    %v829 = vunpack.c.l.b16 %v418
    %v830 = vunpack.c.h.b16 %v418
    %v831 = vunpack.c.l.b16 %v419
    %v832 = vunpack.c.h.b16 %v419
    %v833 = vunpack.c.l.b16 %v420
    %v834 = vunpack.c.h.b16 %v420
    %v835 = vunpack.c.l.b16 %v421
    %v836 = vunpack.c.h.b16 %v421
    %v837 = vunpack.c.l.b16 %v422
    %v838 = vunpack.c.h.b16 %v422
    %v839 = vunpack.c.l.b16 %v423
    %v840 = vunpack.c.h.b16 %v423
    %v841 = vunpack.c.l.b16 %v424
    %v842 = vunpack.c.h.b16 %v424
    %v843 = vunpack.c.l.b16 %v425
    %v844 = vunpack.c.h.b16 %v425
    %v845 = vunpack.c.l.b16 %v426
    %v846 = vunpack.c.h.b16 %v426
    %v847 = vunpack.c.l.b16 %v427
    %v848 = vunpack.c.h.b16 %v427
    %v849 = vunpack.c.l.b16 %v428
    %v850 = vunpack.c.h.b16 %v428
    %v851 = vunpack.c.l.b16 %v429
    %v852 = vunpack.c.h.b16 %v429
    %v853 = vunpack.c.l.b16 %v430
    %v854 = vunpack.c.h.b16 %v430
    %v855 = vunpack.c.l.b16 %v431
    %v856 = vunpack.c.h.b16 %v431
    %v857 = vunpack.c.l.b16 %v432
    %v858 = vunpack.c.h.b16 %v432
    %v859 = vunpack.c.l.b16 %v433
    %v860 = vunpack.c.h.b16 %v433
    %v861 = vunpack.c.l.b16 %v434
    %v862 = vunpack.c.h.b16 %v434
    %v863 = vpack.c.b16 %v673, %v671
    %v864 = vpack.c.b16 %v674, %v672
    %v865 = vpack.c.b16 %v677, %v675
    %v866 = vpack.c.b16 %v678, %v676
    %v867 = vpack.c.b16 %v681, %v679
    %v868 = vpack.c.b16 %v682, %v680
    %v869 = vpack.c.b16 %v685, %v683
    %v870 = vpack.c.b16 %v686, %v684
    %v871 = vpack.c.b16 %v689, %v687
    %v872 = vpack.c.b16 %v690, %v688
    %v873 = vpack.c.b16 %v693, %v691
    %v874 = vpack.c.b16 %v694, %v692
    %v875 = vpack.c.b16 %v697, %v695
    %v876 = vpack.c.b16 %v698, %v696
    %v877 = vpack.c.b16 %v701, %v699
    %v878 = vpack.c.b16 %v702, %v700
    %v879 = vpack.c.b16 %v705, %v703
    %v880 = vpack.c.b16 %v706, %v704
    %v881 = vpack.c.b16 %v709, %v707
    %v882 = vpack.c.b16 %v710, %v708
    %v883 = vpack.c.b16 %v713, %v711
    %v884 = vpack.c.b16 %v714, %v712
    %v885 = vpack.c.b16 %v717, %v715
    %v886 = vpack.c.b16 %v718, %v716
    %v887 = vpack.c.b16 %v721, %v719
    %v888 = vpack.c.b16 %v722, %v720
    %v889 = vpack.c.b16 %v725, %v723
    %v890 = vpack.c.b16 %v726, %v724
    %v891 = vpack.c.b16 %v729, %v727
    %v892 = vpack.c.b16 %v730, %v728
    %v893 = vpack.c.b16 %v733, %v731
    %v894 = vpack.c.b16 %v734, %v732
    %v895 = vpack.c.b16 %v737, %v735
    %v896 = vpack.c.b16 %v738, %v736
    %v897 = vpack.c.b16 %v741, %v739
    %v898 = vpack.c.b16 %v742, %v740
    %v899 = vpack.c.b16 %v745, %v743
    %v900 = vpack.c.b16 %v746, %v744
    %v901 = vpack.c.b16 %v749, %v747
    %v902 = vpack.c.b16 %v750, %v748
    %v903 = vpack.c.b16 %v753, %v751
    %v904 = vpack.c.b16 %v754, %v752
    %v905 = vpack.c.b16 %v757, %v755
    %v906 = vpack.c.b16 %v758, %v756
    %v907 = vpack.c.b16 %v761, %v759
    %v908 = vpack.c.b16 %v762, %v760
    %v909 = vpack.c.b16 %v765, %v763
    %v910 = vpack.c.b16 %v766, %v764
    %v911 = vpack.c.b16 %v769, %v767
    %v912 = vpack.c.b16 %v770, %v768
    %v913 = vpack.c.b16 %v773, %v771
    %v914 = vpack.c.b16 %v774, %v772
    %v915 = vpack.c.b16 %v777, %v775
    %v916 = vpack.c.b16 %v778, %v776
    %v917 = vpack.c.b16 %v781, %v779
    %v918 = vpack.c.b16 %v782, %v780
    %v919 = vpack.c.b16 %v785, %v783
    %v920 = vpack.c.b16 %v786, %v784
    %v921 = vpack.c.b16 %v789, %v787
    %v922 = vpack.c.b16 %v790, %v788
    %v923 = vpack.c.b16 %v793, %v791
    %v924 = vpack.c.b16 %v794, %v792
    %v925 = vpack.c.b16 %v797, %v795
    %v926 = vpack.c.b16 %v798, %v796
    %v927 = vpack.c.b16 %v801, %v799
    %v928 = vpack.c.b16 %v802, %v800
    %v929 = vpack.c.b16 %v805, %v803
    %v930 = vpack.c.b16 %v806, %v804
    %v931 = vpack.c.b16 %v809, %v807
    %v932 = vpack.c.b16 %v810, %v808
    %v933 = vpack.c.b16 %v813, %v811
    %v934 = vpack.c.b16 %v814, %v812
    %v935 = vpack.c.b16 %v817, %v815
    %v936 = vpack.c.b16 %v818, %v816
    %v937 = vpack.c.b16 %v821, %v819
    %v938 = vpack.c.b16 %v822, %v820
    %v939 = vpack.c.b16 %v825, %v823
    %v940 = vpack.c.b16 %v826, %v824
    %v941 = vpack.c.b16 %v829, %v827
    %v942 = vpack.c.b16 %v830, %v828
    %v943 = vpack.c.b16 %v833, %v831
    %v944 = vpack.c.b16 %v834, %v832
    %v945 = vpack.c.b16 %v837, %v835
    %v946 = vpack.c.b16 %v838, %v836
    %v947 = vpack.c.b16 %v841, %v839
    %v948 = vpack.c.b16 %v842, %v840
    %v949 = vpack.c.b16 %v845, %v843
    %v950 = vpack.c.b16 %v846, %v844
    %v951 = vpack.c.b16 %v849, %v847
    %v952 = vpack.c.b16 %v850, %v848
    %v953 = vpack.c.b16 %v853, %v851
    %v954 = vpack.c.b16 %v854, %v852
    %v955 = vpack.c.b16 %v857, %v855
    %v956 = vpack.c.b16 %v858, %v856
    %v957 = vpack.c.b16 %v861, %v859
    %v958 = vpack.c.b16 %v862, %v860
    %1055 = vmatprep.subr.bf16.mxu0 %v878
    %1056 = vmatpush1.bf16.msra.mxu0 %v877
    %1057 = vmatprep.subr.bf16.mxu0 %v876
    %1058 = vmatpush1.bf16.msra.mxu0 %v875
    %1059 = vmatprep.subr.bf16.mxu0 %v874
    %1060 = vmatpush1.bf16.msra.mxu0 %v873
    %1061 = vmatprep.subr.bf16.mxu0 %v872
    %1062 = vmatpush1.bf16.msra.mxu0 %v871
    %1063 = vmatprep.subr.bf16.mxu0 %v870
    %1064 = vmatpush1.bf16.msra.mxu0 %v869
    %1065 = vmatprep.subr.bf16.mxu0 %v868
    %1066 = vmatpush1.bf16.msra.mxu0 %v867
    %1067 = vmatprep.subr.bf16.mxu0 %v866
    %1068 = vmatpush1.bf16.msra.mxu0 %v865
    %1069 = vmatprep.subr.bf16.mxu0 %v864
    %1070 = vmatpush1.bf16.msra.mxu0 %v863
    %1071 = vmatprep.subr.bf16.mxu0 %v894
    %1072 = vmatpush2.bf16.msra.mxu0 %v893
    %1073 = vmatprep.subr.bf16.mxu0 %v892
    %1074 = vmatpush2.bf16.msra.mxu0 %v891
    %1075 = vmatprep.subr.bf16.mxu0 %v890
    %1076 = vmatpush2.bf16.msra.mxu0 %v889
    %1077 = vmatprep.subr.bf16.mxu0 %v888
    %1078 = vmatpush2.bf16.msra.mxu0 %v887
    %1079 = vmatprep.subr.bf16.mxu0 %v886
    %1080 = vmatpush2.bf16.msra.mxu0 %v885
    %1081 = vmatprep.subr.bf16.mxu0 %v884
    %1082 = vmatpush2.bf16.msra.mxu0 %v883
    %1083 = vmatprep.subr.bf16.mxu0 %v882
    %1084 = vmatpush2.bf16.msra.mxu0 %v881
    %1085 = vmatprep.subr.bf16.mxu0 %v880
    %1086 = vmatpush2.bf16.msra.mxu0 %v879
    %1087 = vmatprep.mubr.bf16.mxu0 %v269
    %1088 = vmatmul.mubr.bf16.gmra.mxu0 %v268
    %v1089 = vpop.f32.mrf.mxu0
    %v1090 = vadd.f32 %v567, %v1089
    %v1091 = vpop.f32.mrf.mxu0
    %v1092 = vadd.f32 %v569, %v1091
    %v1093 = vpop.f32.mrf.mxu0
    %v1094 = vadd.f32 %v571, %v1093
    %v1095 = vpop.f32.mrf.mxu0
    %v1096 = vadd.f32 %v573, %v1095
    %1097 = vdwg.mxu0
    %1098 = vmatprep.subr.bf16.mxu0 %v910
    %1099 = vmatpush1.bf16.msra.mxu0 %v909
    %1100 = vmatprep.subr.bf16.mxu0 %v908
    %1101 = vmatpush1.bf16.msra.mxu0 %v907
    %1102 = vmatprep.subr.bf16.mxu0 %v906
    %1103 = vmatpush1.bf16.msra.mxu0 %v905
    %1104 = vmatprep.subr.bf16.mxu0 %v904
    %1105 = vmatpush1.bf16.msra.mxu0 %v903
    %1106 = vmatprep.subr.bf16.mxu0 %v902
    %1107 = vmatpush1.bf16.msra.mxu0 %v901
    %1108 = vmatprep.subr.bf16.mxu0 %v900
    %1109 = vmatpush1.bf16.msra.mxu0 %v899
    %1110 = vmatprep.subr.bf16.mxu0 %v898
    %1111 = vmatpush1.bf16.msra.mxu0 %v897
    %1112 = vmatprep.subr.bf16.mxu0 %v896
    %1113 = vmatpush1.bf16.msra.mxu0 %v895
    %1114 = vmatprep.subr.bf16.mxu0 %v926
    %1115 = vmatpush2.bf16.msra.mxu0 %v925
    %1116 = vmatprep.subr.bf16.mxu0 %v924
    %1117 = vmatpush2.bf16.msra.mxu0 %v923
    %1118 = vmatprep.subr.bf16.mxu0 %v922
    %1119 = vmatpush2.bf16.msra.mxu0 %v921
    %1120 = vmatprep.subr.bf16.mxu0 %v920
    %1121 = vmatpush2.bf16.msra.mxu0 %v919
    %1122 = vmatprep.subr.bf16.mxu0 %v918
    %1123 = vmatpush2.bf16.msra.mxu0 %v917
    %1124 = vmatprep.subr.bf16.mxu0 %v916
    %1125 = vmatpush2.bf16.msra.mxu0 %v915
    %1126 = vmatprep.subr.bf16.mxu0 %v914
    %1127 = vmatpush2.bf16.msra.mxu0 %v913
    %1128 = vmatprep.subr.bf16.mxu0 %v912
    %1129 = vmatpush2.bf16.msra.mxu0 %v911
    %1130 = vmatprep.mubr.bf16.mxu0 %v271
    %1131 = vmatmul.mubr.bf16.gmra.mxu0 %v270
    %v1132 = vpop.f32.mrf.mxu0
    %v1133 = vadd.f32 %v1090, %v1132
    %v1134 = vpop.f32.mrf.mxu0
    %v1135 = vadd.f32 %v1092, %v1134
    %v1136 = vpop.f32.mrf.mxu0
    %v1137 = vadd.f32 %v1094, %v1136
    %v1138 = vpop.f32.mrf.mxu0
    %v1139 = vadd.f32 %v1096, %v1138
    %1140 = vdwg.mxu0
    %1141 = vmatprep.subr.bf16.mxu0 %v942
    %1142 = vmatpush1.bf16.msra.mxu0 %v941
    %1143 = vmatprep.subr.bf16.mxu0 %v940
    %1144 = vmatpush1.bf16.msra.mxu0 %v939
    %1145 = vmatprep.subr.bf16.mxu0 %v938
    %1146 = vmatpush1.bf16.msra.mxu0 %v937
    %1147 = vmatprep.subr.bf16.mxu0 %v936
    %1148 = vmatpush1.bf16.msra.mxu0 %v935
    %1149 = vmatprep.subr.bf16.mxu0 %v934
    %1150 = vmatpush1.bf16.msra.mxu0 %v933
    %1151 = vmatprep.subr.bf16.mxu0 %v932
    %1152 = vmatpush1.bf16.msra.mxu0 %v931
    %1153 = vmatprep.subr.bf16.mxu0 %v930
    %1154 = vmatpush1.bf16.msra.mxu0 %v929
    %1155 = vmatprep.subr.bf16.mxu0 %v928
    %1156 = vmatpush1.bf16.msra.mxu0 %v927
    %1157 = vmatprep.subr.bf16.mxu0 %v958
    %1158 = vmatpush2.bf16.msra.mxu0 %v957
    %1159 = vmatprep.subr.bf16.mxu0 %v956
    %1160 = vmatpush2.bf16.msra.mxu0 %v955
    %1161 = vmatprep.subr.bf16.mxu0 %v954
    %1162 = vmatpush2.bf16.msra.mxu0 %v953
    %1163 = vmatprep.subr.bf16.mxu0 %v952
    %1164 = vmatpush2.bf16.msra.mxu0 %v951
    %1165 = vmatprep.subr.bf16.mxu0 %v950
    %1166 = vmatpush2.bf16.msra.mxu0 %v949
    %1167 = vmatprep.subr.bf16.mxu0 %v948
    %1168 = vmatpush2.bf16.msra.mxu0 %v947
    %1169 = vmatprep.subr.bf16.mxu0 %v946
    %1170 = vmatpush2.bf16.msra.mxu0 %v945
    %1171 = vmatprep.subr.bf16.mxu0 %v944
    %1172 = vmatpush2.bf16.msra.mxu0 %v943
    %1173 = vmatprep.mubr.bf16.mxu0 %v273
    %1174 = vmatmul.mubr.bf16.gmra.mxu0 %v272
    %v1175 = vpop.f32.mrf.mxu0
    %v1176 = vadd.f32 %v1133, %v1175
    %v1177 = vpop.f32.mrf.mxu0
    %v1178 = vadd.f32 %v1135, %v1177
    %v1179 = vpop.f32.mrf.mxu0
    %v1180 = vadd.f32 %v1137, %v1179
    %v1181 = vpop.f32.mrf.mxu0
    %v1182 = vadd.f32 %v1139, %v1181
    %1183 = vdwg.mxu0
    %v1184 = vld [vmem:[%s6] sm:$0x3]
    %v1186 = vlaneseq
    %v1187 = vshrl.u32 %v1186, 7
    %v1188 = vsub.s32 0, %v1187
    %v1189 = vrot.slane %v1184, %v1188
    %v1190 = vlaneseq
    %v1191 = vshrl.u32 %v1190, 7
    %v1192 = vsub.s32 1, %v1191
    %v1193 = vrot.slane %v1184, %v1192
    %v1196 = vadd.f32 %v1176, %v1189
    %v1197 = vadd.f32 %v1178, %v1193
    %v1198 = vadd.f32 %v1180, %v1189
    %v1199 = vadd.f32 %v1182, %v1193
    %v1200 = vmax.f32 %v1196, 0.0
    %v1201 = vmax.f32 %v1197, 0.0
    %v1202 = vmax.f32 %v1198, 0.0
    %v1203 = vmax.f32 %v1199, 0.0
    %v1204 = vpack.c.bf16 %v1202, %v1200
    %v1205 = vpack.c.bf16 %v1203, %v1201
    %v1206 = vld [vmem:[#allocation9] sm:$0xf]
    %v1207 = vld [vmem:[#allocation9 + $0x4] sm:$0xf]
    %v1208 = vld [vmem:[#allocation9 + $0x8] sm:$0xf]
    %v1209 = vld [vmem:[#allocation9 + $0xc] sm:$0xf]
    %v1210 = vld [vmem:[#allocation9 + $0x10] sm:$0xf]
    %v1211 = vld [vmem:[#allocation9 + $0x14] sm:$0xf]
    %v1212 = vld [vmem:[#allocation9 + $0x18] sm:$0xf]
    %v1213 = vld [vmem:[#allocation9 + $0x1c] sm:$0xf]
    %v1214 = vld [vmem:[#allocation9 + $0x20] sm:$0xf]
    %v1215 = vld [vmem:[#allocation9 + $0x24] sm:$0xf]
    %v1216 = vld [vmem:[#allocation9 + $0x28] sm:$0xf]
    %v1217 = vld [vmem:[#allocation9 + $0x2c] sm:$0xf]
    %v1218 = vld [vmem:[#allocation9 + $0x30] sm:$0xf]
    %v1219 = vld [vmem:[#allocation9 + $0x34] sm:$0xf]
    %v1220 = vld [vmem:[#allocation9 + $0x38] sm:$0xf]
    %v1221 = vld [vmem:[#allocation9 + $0x3c] sm:$0xf]
    %v1222 = vld [vmem:[#allocation9 + $0x40] sm:$0xf]
    %v1223 = vld [vmem:[#allocation9 + $0x44] sm:$0xf]
    %v1224 = vld [vmem:[#allocation9 + $0x48] sm:$0xf]
    %v1225 = vld [vmem:[#allocation9 + $0x4c] sm:$0xf]
    %v1226 = vld [vmem:[#allocation9 + $0x50] sm:$0xf]
    %v1227 = vld [vmem:[#allocation9 + $0x54] sm:$0xf]
    %v1228 = vld [vmem:[#allocation9 + $0x58] sm:$0xf]
    %v1229 = vld [vmem:[#allocation9 + $0x5c] sm:$0xf]
    %v1230 = vld [vmem:[#allocation9 + $0x60] sm:$0xf]
    %v1231 = vld [vmem:[#allocation9 + $0x64] sm:$0xf]
    %v1232 = vld [vmem:[#allocation9 + $0x68] sm:$0xf]
    %v1233 = vld [vmem:[#allocation9 + $0x6c] sm:$0xf]
    %v1234 = vld [vmem:[#allocation9 + $0x70] sm:$0xf]
    %v1235 = vld [vmem:[#allocation9 + $0x74] sm:$0xf]
    %v1236 = vld [vmem:[#allocation9 + $0x78] sm:$0xf]
    %v1237 = vld [vmem:[#allocation9 + $0x7c] sm:$0xf]
    %v1238 = vld [vmem:[#allocation10] sm:$0x1]
    %v1240 = vlaneseq
    %v1241 = vshrl.u32 %v1240, 7
    %v1242 = vsub.s32 0, %v1241
    %v1243 = vrot.slane %v1238, %v1242
    %v1277 = vunpack.c.l.b16 %v1206
    %v1278 = vunpack.c.l.b16 %v1207
    %v1279 = vunpack.c.l.b16 %v1208
    %v1280 = vunpack.c.l.b16 %v1209
    %v1281 = vunpack.c.l.b16 %v1210
    %v1282 = vunpack.c.l.b16 %v1211
    %v1283 = vunpack.c.l.b16 %v1212
    %v1284 = vunpack.c.l.b16 %v1213
    %v1285 = vunpack.c.l.b16 %v1214
    %v1286 = vunpack.c.l.b16 %v1215
    %v1287 = vunpack.c.l.b16 %v1216
    %v1288 = vunpack.c.l.b16 %v1217
    %v1289 = vunpack.c.l.b16 %v1218
    %v1290 = vunpack.c.l.b16 %v1219
    %v1291 = vunpack.c.l.b16 %v1220
    %v1292 = vunpack.c.l.b16 %v1221
    %v1293 = vunpack.c.l.b16 %v1222
    %v1294 = vunpack.c.l.b16 %v1223
    %v1295 = vunpack.c.l.b16 %v1224
    %v1296 = vunpack.c.l.b16 %v1225
    %v1297 = vunpack.c.l.b16 %v1226
    %v1298 = vunpack.c.l.b16 %v1227
    %v1299 = vunpack.c.l.b16 %v1228
    %v1300 = vunpack.c.l.b16 %v1229
    %v1301 = vunpack.c.l.b16 %v1230
    %v1302 = vunpack.c.l.b16 %v1231
    %v1303 = vunpack.c.l.b16 %v1232
    %v1304 = vunpack.c.l.b16 %v1233
    %v1305 = vunpack.c.l.b16 %v1234
    %v1306 = vunpack.c.l.b16 %v1235
    %v1307 = vunpack.c.l.b16 %v1236
    %v1308 = vunpack.c.l.b16 %v1237
    %v1309 = vpack.c.b16 %v1278, %v1277
    %v1310 = vpack.c.b16 %v1280, %v1279
    %v1311 = vpack.c.b16 %v1282, %v1281
    %v1312 = vpack.c.b16 %v1284, %v1283
    %v1313 = vpack.c.b16 %v1286, %v1285
    %v1314 = vpack.c.b16 %v1288, %v1287
    %v1315 = vpack.c.b16 %v1290, %v1289
    %v1316 = vpack.c.b16 %v1292, %v1291
    %v1317 = vpack.c.b16 %v1294, %v1293
    %v1318 = vpack.c.b16 %v1296, %v1295
    %v1319 = vpack.c.b16 %v1298, %v1297
    %v1320 = vpack.c.b16 %v1300, %v1299
    %v1321 = vpack.c.b16 %v1302, %v1301
    %v1322 = vpack.c.b16 %v1304, %v1303
    %v1323 = vpack.c.b16 %v1306, %v1305
    %v1324 = vpack.c.b16 %v1308, %v1307
    %1341 = vmatprep.subr.bf16.mxu0 0
    %1342 = vmatpush1.bf16.msra.mxu0 %v1316
    %1343 = vmatprep.subr.bf16.mxu0 0
    %1344 = vmatpush1.bf16.msra.mxu0 %v1315
    %1345 = vmatprep.subr.bf16.mxu0 0
    %1346 = vmatpush1.bf16.msra.mxu0 %v1314
    %1347 = vmatprep.subr.bf16.mxu0 0
    %1348 = vmatpush1.bf16.msra.mxu0 %v1313
    %1349 = vmatprep.subr.bf16.mxu0 0
    %1350 = vmatpush1.bf16.msra.mxu0 %v1312
    %1351 = vmatprep.subr.bf16.mxu0 0
    %1352 = vmatpush1.bf16.msra.mxu0 %v1311
    %1353 = vmatprep.subr.bf16.mxu0 0
    %1354 = vmatpush1.bf16.msra.mxu0 %v1310
    %1355 = vmatprep.subr.bf16.mxu0 0
    %1356 = vmatpush1.bf16.msra.mxu0 %v1309
    %1357 = vmatprep.subr.bf16.mxu0 0
    %1358 = vmatpush2.bf16.msra.mxu0 %v1324
    %1359 = vmatprep.subr.bf16.mxu0 0
    %1360 = vmatpush2.bf16.msra.mxu0 %v1323
    %1361 = vmatprep.subr.bf16.mxu0 0
    %1362 = vmatpush2.bf16.msra.mxu0 %v1322
    %1363 = vmatprep.subr.bf16.mxu0 0
    %1364 = vmatpush2.bf16.msra.mxu0 %v1321
    %1365 = vmatprep.subr.bf16.mxu0 0
    %1366 = vmatpush2.bf16.msra.mxu0 %v1320
    %1367 = vmatprep.subr.bf16.mxu0 0
    %1368 = vmatpush2.bf16.msra.mxu0 %v1319
    %1369 = vmatprep.subr.bf16.mxu0 0
    %1370 = vmatpush2.bf16.msra.mxu0 %v1318
    %1371 = vmatprep.subr.bf16.mxu0 0
    %1372 = vmatpush2.bf16.msra.mxu0 %v1317
    %1373 = vmatprep.mubr.bf16.mxu0 %v1205
    %1374 = vmatmul.mubr.bf16.gmra.mxu0 %v1204
    %v1375 = vpop.f32.mrf.mxu0
    %v1376 = vadd.f32 %v1243, %v1375
    %v1377 = vpop.f32.mrf.mxu0
    %v1378 = vpop.f32.mrf.mxu0
    %v1379 = vadd.f32 %v1243, %v1378
    %v1380 = vpop.f32.mrf.mxu0
    %1381 = vdwg.mxu0
    %v1382 = vmax.f32 %v1376, 0.0
    %v1383 = vmax.f32 %v1379, 0.0
    %v1384 = vld [vmem:[%s9] sm:$0xf]
    %v1385 = vpack.c.bf16 %v1383, %v1382
    %1386 = vmatprep.subr.bf16.mxu0 0
    %1387 = vmatpush1.bf16.xpose.msra.mxu0 0
    %1388 = vmatprep.subr.bf16.mxu0 0
    %1389 = vmatpush1.bf16.xpose.msra.mxu0 0
    %1390 = vmatprep.subr.bf16.mxu0 0
    %1391 = vmatpush1.bf16.xpose.msra.mxu0 0
    %1392 = vmatprep.subr.bf16.mxu0 0
    %1393 = vmatpush1.bf16.xpose.msra.mxu0 0
    %1394 = vmatprep.subr.bf16.mxu0 0
    %1395 = vmatpush1.bf16.xpose.msra.mxu0 0
    %1396 = vmatprep.subr.bf16.mxu0 0
    %1397 = vmatpush1.bf16.xpose.msra.mxu0 0
    %1398 = vmatprep.subr.bf16.mxu0 0
    %1399 = vmatpush1.bf16.xpose.msra.mxu0 0
    %1400 = vmatprep.subr.bf16.mxu0 0
    %1401 = vmatpush1.bf16.xpose.msra.mxu0 %v1385
    %1402 = vmatprep.subr.bf16.mxu0 0
    %1403 = vmatpush2.bf16.xpose.msra.mxu0 0
    %1404 = vmatprep.subr.bf16.mxu0 0
    %1405 = vmatpush2.bf16.xpose.msra.mxu0 0
    %1406 = vmatprep.subr.bf16.mxu0 0
    %1407 = vmatpush2.bf16.xpose.msra.mxu0 0
    %1408 = vmatprep.subr.bf16.mxu0 0
    %1409 = vmatpush2.bf16.xpose.msra.mxu0 0
    %1410 = vmatprep.subr.bf16.mxu0 0
    %1411 = vmatpush2.bf16.xpose.msra.mxu0 0
    %1412 = vmatprep.subr.bf16.mxu0 0
    %1413 = vmatpush2.bf16.xpose.msra.mxu0 0
    %1414 = vmatprep.subr.bf16.mxu0 0
    %1415 = vmatpush2.bf16.xpose.msra.mxu0 0
    %1416 = vmatprep.subr.bf16.mxu0 0
    %1417 = vmatpush2.bf16.xpose.msra.mxu0 0
    %1418 = vmatprep.mubr.bf16.mxu0 0
    %1419 = vmatmul.mubr.bf16.gmra.mxu0 %v1384
    %v1420 = vpop.f32.mrf.mxu0
    %v1421 = vadd.f32 0.0, %v1420
    %v1422 = vpop.f32.mrf.mxu0
    %v1423 = vpop.f32.mrf.mxu0
    %v1424 = vpop.f32.mrf.mxu0
    %1425 = vdwg.mxu0
    %v1427 = vrot.slane %v1421, 1
    %v1429 = vmax.f32 %v1421, %v1427
    %v1430 = vsub.f32 %v1421, %v1429
    %v1431 = vmul.f32 %v1430, 1.442695
    %v1432 = vpow.pop %v1431
    %v1434 = vrot.slane %v1429, 7
    %v1436 = vsub.f32 %v1421, %v1434
    %v1437 = vmul.f32 %v1436, 1.442695
    %v1438 = vpow.pop %v1437
    %v1440 = vrot.slane %v1438, 1
    %v1442 = vadd.f32 %v1432, %v1440
    %v1443 = vrcp.pop %v1442
    %v1444 = vmul.f32 %v1432, %v1443
    %vm1445 = vcmask 122880
    %1446 = vst.msk [vmem:[%s10] sm:$0x1] %vm1445, %v1444
    %v1448 = vrot.slane %v1442, 7
    %v1450 = vrcp.pop %v1448
    %v1451 = vmul.f32 %v1438, %v1450
    %vm1452 = vcmask 123905
    %1453 = vst.msk [vmem:[%s10] sm:$0x2] %vm1452, %v1451
    // Predicated region
    $region66: #{job_listing_classifier.1} parent=1 // pred_check
      _
    $region67: #{job_listing_classifier.1} parent=1 // pred_check_branch
      %1455 = sbr.rel (0) target = $region69
    $region68: #{job_listing_classifier.1} parent=1 // pred_region
      _
    $region69: #{job_listing_classifier.1} parent=1 // pred_fallthru
      _
    // Predicated region
    $region70: #{job_listing_classifier.1} parent=1 // pred_check
      _
    $region71: #{job_listing_classifier.1} parent=1 // pred_check_branch
      %1457 = sbr.rel (0) target = $region73
    $region72: #{job_listing_classifier.1} parent=1 // pred_region
      _
    $region73: #{job_listing_classifier.1} parent=1 // pred_fallthru
      _
    %1458 = vsyncpa [#allocation3], 1
    %1459 = vsyncpa [#allocation5], 1
    %1460 = vsyncpa [#allocation8], 1
    %1461 = vsyncpa [#allocation11], 1

</llo_original>
